<compile_context>
chip_gen: v7x
topology: tpu7x:2x2x1
jax: 0.10.0
libtpu: 0.0.40
codegen_flags: <defaults>
</compile_context>

<pallas_src>
import functools

import jax
import jax.numpy as jnp
from jax.experimental import pallas as pl
from jax.experimental.pallas import tpu as pltpu

EPS = 1e-12


# ----------------------------------------------------------------------------
# VMEM-aware tile selection (v5e/v6e: 128 MiB, v7x: 64 MiB per core)
# ----------------------------------------------------------------------------
def _vmem_capacity_bytes():
    try:
        return int(pltpu.get_tpu_info().vmem_capacity_bytes)
    except Exception:
        return 64 * 1024 * 1024  # conservative (v7x per-core VMEM)


def _divisor_tiles(total):
    """Candidate tile sizes: the full extent, then multiple-of-8 divisors, descending."""
    tiles = [total]
    t = (total // 8) * 8
    while t >= 8:
        if t != total and total % t == 0:
            tiles.append(t)
        t -= 8
    return tiles


def _pick_tiles(B, N, D, P, x_itemsize):
    cap = _vmem_capacity_bytes()
    budget = cap // 2  # leave headroom for compiler scratch / neighboring fusions

    def usage(tb, tn):
        return (2 * tb * tn * D * x_itemsize   # x blocks (double-buffered)
                + 2 * tb * P * D * 4           # similarity output blocks
                + 2 * tb * D * 4               # x_norm output blocks
                + tb * D * 4                   # f32 token-sum scratch
                + 2 * P * D * 4)               # p_norm input blocks

    tb_cands = _divisor_tiles(B)
    tn_cands = _divisor_tiles(N)

    tb, tn = tb_cands[-1], tn_cands[-1]        # fallback: smallest blocks
    for tn_c in tn_cands:                      # prefer full-N blocks first
        fits = [t for t in tb_cands if usage(t, tn_c) <= budget]
        if fits:
            best = fits[0]                     # largest batch tile that fits
            if B // best > 1:
                # grid > 1: prefer an even grid count for v7x's 2 TensorCores
                even = [t for t in fits if (B // t) % 2 == 0]
                if even:
                    best = even[0]
            tb, tn = best, tn_c
            break

    # Cap the scoped limit at ~2x usage (never near full physical VMEM).
    vmem_limit = int(min(cap - (16 << 20), max(2 * usage(tb, tn), 32 << 20)))
    return tb, tn, vmem_limit


# ----------------------------------------------------------------------------
# Kernel: token-sum (f32 accumulate over the N axis) -> L2-normalize query
#         -> lane-dense per-dimension similarity (TB, P, D)
# ----------------------------------------------------------------------------
def _sim_kernel(x_ref, pnorm_ref, xnorm_ref, sim_ref, acc_ref):
    j = pl.program_id(1)

    @pl.when(j == 0)
    def _():
        acc_ref[...] = jnp.zeros_like(acc_ref)

    # Token sum with f32 accumulation; the 1/N factor cancels under L2 norm.
    acc_ref[...] += jnp.sum(x_ref[...], axis=1, dtype=jnp.float32)   # (TB, D)

    @pl.when(j == pl.num_programs(1) - 1)
    def _():
        x_sum = acc_ref[...]                                         # (TB, D)
        ss = jnp.sum(x_sum * x_sum, axis=1, keepdims=True)           # (TB, 1)
        x_norm = x_sum * jax.lax.rsqrt(jnp.maximum(ss, EPS))         # (TB, D)
        xnorm_ref[...] = x_norm
        p_norm = pnorm_ref[...]                                      # (P, D)
        # Lane-dense: sim[b, p, d] = x_norm[b, d] * p_norm[p, d]  (D in lanes).
        sim_ref[...] = x_norm[:, None, :] * p_norm[None, :, :]


def sim_call(x_embed, p_norm):
    B, N, D = x_embed.shape
    P, _ = p_norm.shape
    tb, tn, vmem_limit = _pick_tiles(B, N, D, P, x_embed.dtype.itemsize)
    grid = (B // tb, N // tn)
    return pl.pallas_call(
        _sim_kernel,
        grid_spec=pltpu.PrefetchScalarGridSpec(
            num_scalar_prefetch=0,
            grid=grid,
            in_specs=[
                pl.BlockSpec((tb, tn, D), lambda i, j: (i, j, 0)),
                pl.BlockSpec((P, D), lambda i, j: (0, 0)),
            ],
            out_specs=[
                pl.BlockSpec((tb, D), lambda i, j: (i, 0)),
                pl.BlockSpec((tb, P, D), lambda i, j: (i, 0, 0)),
            ],
            scratch_shapes=[pltpu.VMEM((tb, D), jnp.float32)],
        ),
        out_shape=(
            jax.ShapeDtypeStruct((B, D), jnp.float32),      # x_embed_norm
            jax.ShapeDtypeStruct((B, P, D), jnp.float32),   # similarity (B,P,D)
        ),
        compiler_params=pltpu.CompilerParams(
            dimension_semantics=("parallel", "arbitrary"),  # batch parallel, token reduce
            vmem_limit_bytes=vmem_limit,
        ),
    )(x_embed, p_norm)


# ----------------------------------------------------------------------------
# Forward (kernel + small XLA glue)
# ----------------------------------------------------------------------------
def _l2_normalize(x, axis):
    ss = jnp.sum(x * x, axis=axis, keepdims=True)
    return x * jax.lax.rsqrt(jnp.maximum(ss, EPS))


@functools.partial(jax.jit, static_argnames=("length", "pool_size", "top_k"))
def prompt_forward(x_embed, prompt, prompt_key, *, length, pool_size, top_k):
    B, _, D = x_embed.shape

    # Prompt-key normalization: tiny (P, D) op -> plain XLA (no extra launch).
    p_norm = _l2_normalize(prompt_key.astype(jnp.float32), axis=1)     # (P, D)

    x_norm, sim_bpd = sim_call(x_embed, p_norm)                        # (B,D), (B,P,D)

    # Reference layout (B, D, P): similarity[b,d,p] = x_norm[b,d]*key_norm[p,d]
    similarity = jnp.transpose(sim_bpd, (0, 2, 1))                     # (B, D, P)

    # top-k prompts per (batch, dim) — P=pool_size entries, plain JAX glue.
    _, idx = jax.lax.top_k(similarity, top_k)                          # (B, D, K)

    # batchwise_prompt: emulate torch.unique(sorted=True, return_counts=True)
    # + pad with min(idx)/0, then take top_k ids by count.  Dense one-hot
    # compare+reduce instead of bincount (avoids serialized scatter-add).
    ids = jnp.arange(pool_size, dtype=idx.dtype)
    counts = jnp.sum((idx[..., None] == ids).astype(jnp.int32), axis=(0, 1, 2))
    present = counts > 0
    order = jnp.argsort(jnp.where(present, ids, pool_size))
    min_id = jnp.min(idx)
    prompt_id = jnp.where(present[order], order, min_id)   # sorted uniques, padded
    id_counts = counts[order]                              # padded with 0
    _, major_idx = jax.lax.top_k(id_counts, top_k)
    # TODO(synk): tie-breaking between equal counts may differ from torch.topk.
    major_prompt_id = prompt_id[major_idx].astype(jnp.int32)           # (K,)

    # Reference shapes kept for API fidelity.
    # TODO(synk): prompt_idx / prompted_embedding are pure broadcasts; a
    # consumer accepting (K,) + (K, L, D) would save the redundant HBM writes.
    prompt_idx = jnp.broadcast_to(
        major_prompt_id[None, :, None, None], (B, top_k, length, D))

    # XLA gather of the K selected prompts (tiny; no pallas_call needed).
    raw = jnp.take(prompt, major_prompt_id, axis=0)                    # (K, L, D)
    batched_prompt = jnp.broadcast_to(
        raw.reshape(1, top_k * length, D), (B, top_k * length, D))

    return {
        "prompt_idx": prompt_idx,                                        # (B,K,L,D)
        "prompt_norm": jnp.transpose(p_norm).reshape(D, 1, pool_size),   # (D,1,P)
        "x_embed_norm": jnp.transpose(x_norm).reshape(D, B, 1),          # (D,B,1)
        "similarity": similarity,                                        # (B,D,P)
        "total_prompt_len": top_k * length,
        "prompted_embedding": batched_prompt,                            # (B,K*L,D)
    }


if __name__ == "__main__":
    # Small shapes consistent with the module (pool_size=10, length=5, top_k=5).
    B, N, D = 2, 8, 32
    POOL, LEN, TOPK = 10, 5, 5

    key = jax.random.PRNGKey(0)
    k1, k2, k3 = jax.random.split(key, 3)
    x_embed = jax.random.normal(k1, (B, N, D), dtype=jnp.float32)
    # deterministic "uniform(-1, 1)" init matching nn.init.uniform_(-1, 1)
    prompt = jax.random.uniform(k2, (POOL, LEN, D), minval=-1.0, maxval=1.0,
                                dtype=jnp.float32)
    prompt_key_param = jax.random.uniform(k3, (POOL, D), minval=-1.0, maxval=1.0,
                                          dtype=jnp.float32)

    out = prompt_forward(x_embed, prompt, prompt_key_param,
                         length=LEN, pool_size=POOL, top_k=TOPK)
    jax.block_until_ready(out)

    assert out["prompted_embedding"].shape == (B, TOPK * LEN, D)
    assert out["similarity"].shape == (B, D, POOL)
    assert out["prompt_idx"].shape == (B, TOPK, LEN, D)
    assert out["x_embed_norm"].shape == (D, B, 1)
    assert out["prompt_norm"].shape == (D, 1, POOL)
    print("KERNEL_OK")
</pallas_src>

<mosaic_0001>
module attributes {stable_mosaic.version = 11 : i64} {
  func.func @_sim_kernel(%arg0: i32, %arg1: i32, %arg2: memref<2x8x32xf32, #tpu.memory_space<vmem>>, %arg3: memref<10x32xf32, #tpu.memory_space<vmem>>, %arg4: memref<2x32xf32, #tpu.memory_space<vmem>>, %arg5: memref<2x10x32xf32, #tpu.memory_space<vmem>>, %arg6: memref<2x32xf32, #tpu.memory_space<vmem>>) attributes {dimension_semantics = [#tpu.dimension_semantics<parallel>, #tpu.dimension_semantics<arbitrary>], iteration_bounds = array<i64: 1, 1>, scalar_prefetch = 0 : i64, scratch_operands = 1 : i64, tpu.core_type = #tpu.core_type<tc>, window_params = [{transform_indices = @transform_0, window_bounds = array<i64: 2, 8, 32>}, {pipeline_mode = #tpu.pipeline_mode<synchronous>, transform_indices = @transform_1, window_bounds = array<i64: 10, 32>}, {transform_indices = @transform_2, window_bounds = array<i64: 2, 32>}, {transform_indices = @transform_3, window_bounds = array<i64: 2, 10, 32>}]} {
    %c0_i32 = arith.constant 0 : i32
    %0 = arith.cmpi eq, %arg1, %c0_i32 : i32
    %1 = arith.extui %0 : i1 to i32
    %c0_i32_0 = arith.constant 0 : i32
    %2 = arith.cmpi ne, %1, %c0_i32_0 : i32
    scf.if %2 {
      %cst_9 = arith.constant 0.000000e+00 : f32
      %11 = vector.broadcast %cst_9 : f32 to vector<2x32xf32>
      %c0_10 = arith.constant 0 : index
      %c0_11 = arith.constant 0 : index
      %12 = vector.load %arg6[%c0_10, %c0_11] : memref<2x32xf32, #tpu.memory_space<vmem>>, vector<2x32xf32>
      tpu.vector_store %arg6[%c0_10, %c0_11], %11 {strides = array<i32>} : memref<2x32xf32, #tpu.memory_space<vmem>>, vector<2x32xf32>,
    } else {
    }
    %c0 = arith.constant 0 : index
    %c0_1 = arith.constant 0 : index
    %3 = vector.load %arg6[%c0, %c0_1] : memref<2x32xf32, #tpu.memory_space<vmem>>, vector<2x32xf32>
    %c0_2 = arith.constant 0 : index
    %c0_3 = arith.constant 0 : index
    %c0_4 = arith.constant 0 : index
    %4 = vector.load %arg2[%c0_2, %c0_3, %c0_4] : memref<2x8x32xf32, #tpu.memory_space<vmem>>, vector<2x8x32xf32>
    %cst = arith.constant dense<0.000000e+00> : vector<2x32xf32>
    %5 = vector.multi_reduction <add>, %4, %cst [1] : vector<2x8x32xf32> to vector<2x32xf32>
    %6 = arith.addf %3, %5 : vector<2x32xf32>
    %c0_5 = arith.constant 0 : index
    %c0_6 = arith.constant 0 : index
    %7 = vector.load %arg6[%c0_5, %c0_6] : memref<2x32xf32, #tpu.memory_space<vmem>>, vector<2x32xf32>
    tpu.vector_store %arg6[%c0_5, %c0_6], %6 {strides = array<i32>} : memref<2x32xf32, #tpu.memory_space<vmem>>, vector<2x32xf32>,
    %c0_i32_7 = arith.constant 0 : i32
    %8 = arith.cmpi eq, %arg1, %c0_i32_7 : i32
    %9 = arith.extui %8 : i1 to i32
    %c0_i32_8 = arith.constant 0 : i32
    %10 = arith.cmpi ne, %9, %c0_i32_8 : i32
    scf.if %10 {
      %c0_9 = arith.constant 0 : index
      %c0_10 = arith.constant 0 : index
      %11 = vector.load %arg6[%c0_9, %c0_10] : memref<2x32xf32, #tpu.memory_space<vmem>>, vector<2x32xf32>
      %12 = arith.mulf %11, %11 : vector<2x32xf32>
      %cst_11 = arith.constant dense<0.000000e+00> : vector<2xf32>
      %13 = vector.multi_reduction <add>, %12, %cst_11 [1] : vector<2x32xf32> to vector<2xf32>
      %14 = vector.shape_cast %13 : vector<2xf32> to vector<2x1xf32>
      %cst_12 = arith.constant 9.99999996E-13 : f32
      %15 = vector.broadcast %cst_12 : f32 to vector<2x1xf32>
      %16 = arith.maximumf %14, %15 : vector<2x1xf32>
      %17 = math.rsqrt %16 : vector<2x1xf32>
      %18 = vector.broadcast %17 : vector<2x1xf32> to vector<2x32xf32>
      %19 = arith.mulf %11, %18 : vector<2x32xf32>
      %c0_13 = arith.constant 0 : index
      %c0_14 = arith.constant 0 : index
      %20 = vector.load %arg4[%c0_13, %c0_14] : memref<2x32xf32, #tpu.memory_space<vmem>>, vector<2x32xf32>
      tpu.vector_store %arg4[%c0_13, %c0_14], %19 {strides = array<i32>} : memref<2x32xf32, #tpu.memory_space<vmem>>, vector<2x32xf32>,
      %c0_15 = arith.constant 0 : index
      %c0_16 = arith.constant 0 : index
      %21 = vector.load %arg3[%c0_15, %c0_16] : memref<10x32xf32, #tpu.memory_space<vmem>>, vector<10x32xf32>
      %22 = vector.shape_cast %19 : vector<2x32xf32> to vector<2x1x32xf32>
      %23 = vector.shape_cast %21 : vector<10x32xf32> to vector<1x10x32xf32>
      %24 = vector.broadcast %22 : vector<2x1x32xf32> to vector<2x10x32xf32>
      %25 = vector.broadcast %23 : vector<1x10x32xf32> to vector<2x10x32xf32>
      %26 = arith.mulf %24, %25 : vector<2x10x32xf32>
      %c0_17 = arith.constant 0 : index
      %c0_18 = arith.constant 0 : index
      %c0_19 = arith.constant 0 : index
      %27 = vector.load %arg5[%c0_17, %c0_18, %c0_19] : memref<2x10x32xf32, #tpu.memory_space<vmem>>, vector<2x10x32xf32>
      tpu.vector_store %arg5[%c0_17, %c0_18, %c0_19], %26 {strides = array<i32>} : memref<2x10x32xf32, #tpu.memory_space<vmem>>, vector<2x10x32xf32>,
    } else {
    }
    return
  }
  func.func @transform_0(%arg0: i32, %arg1: i32) -> (i32, i32, i32) {
    %c0_i32 = arith.constant 0 : i32
    %c0_i32_0 = arith.constant 0 : i32
    return %arg0, %arg1, %c0_i32 : i32, i32, i32
  }
  func.func @transform_1(%arg0: i32, %arg1: i32) -> (i32, i32) {
    %c0_i32 = arith.constant 0 : i32
    %c0_i32_0 = arith.constant 0 : i32
    %c0_i32_1 = arith.constant 0 : i32
    return %c0_i32, %c0_i32_0 : i32, i32
  }
  func.func @transform_2(%arg0: i32, %arg1: i32) -> (i32, i32) {
    %c0_i32 = arith.constant 0 : i32
    %c0_i32_0 = arith.constant 0 : i32
    return %arg0, %c0_i32 : i32, i32
  }
  func.func @transform_3(%arg0: i32, %arg1: i32) -> (i32, i32, i32) {
    %c0_i32 = arith.constant 0 : i32
    %c0_i32_0 = arith.constant 0 : i32
    %c0_i32_1 = arith.constant 0 : i32
    return %arg0, %c0_i32, %c0_i32_0 : i32, i32, i32
  }
}

</mosaic_0001>

<llo_original>
// kernel: prompt_forward.1
$region0: #{prompt_forward.1}
  #allocation0 [shape = 'u32[]', space=smem, size = 0x4, offset = 0x4, fixed_abs, tag = 'smem constant byte address 0x4 - core index']
  #allocation1 [shape = 'u32[144,128]{1,0:T(1,128)}', space=vmem, size = 0x12000, scoped, tag = 'internal scratch']
  #allocation2 [shape = 'f32[2,32]{1,0:T(2,128)}', space=vmem, size = 0x400, scoped, tag = 'scratch operand']
  %s0 = inlined_call_operand.vmem [shape: f32[2,8,32], index: 0, kind: input, shape index: {}]
  %s1 = inlined_call_operand.vmem [shape: f32[10,32], index: 1, kind: input, shape index: {}]
  %s2 = inlined_call_operand.hbm [shape: f32[2,32], index: 2, kind: output, shape index: {0}]
  %s3 = inlined_call_operand.vmem [shape: f32[2,10,32], index: 3, kind: output, shape index: {1}]
  %4 = xla_tuple %s2, %s3
  %s5 = sld [smem:[#allocation0]]
  $region34: #{prompt_forward.1} parent=0
    _
  %s7 = ssub.s32 1, %s5
  %s8 = scalar_select 0, %s7, %s5
  $region1: #{prompt_forward.1} parent=0
    #allocation3 [shape = 'u8[1024]{0}', space=vmem, size = 0x400, scoped, tag = 'output window, operand 0, single buffered']
    #allocation4 [shape = 's32[1]{0}', space=sflag, size = 0x4, scoped, tag = 'scoped memory for prompt_forward.1']
    %9 = vsyncpa [#allocation4], 0
    // Predicated region
    $region2: #{prompt_forward.1} parent=1 // pred_check
      _
    $region3: #{prompt_forward.1} parent=1 // pred_check_branch
      %11 = sbr.rel (0) target = $region5
    $region4: #{prompt_forward.1} parent=1 // pred_region
      _
    $region5: #{prompt_forward.1} parent=1 // pred_fallthru
      _
    // Predicated region
    $region6: #{prompt_forward.1} parent=1 // pred_check
      _
    $region7: #{prompt_forward.1} parent=1 // pred_check_branch
      %13 = sbr.rel (0) target = $region9
    $region8: #{prompt_forward.1} parent=1 // pred_region
      _
    $region9: #{prompt_forward.1} parent=1 // pred_fallthru
      _
    %p14 = scmp.eq.s32.totalorder 0, 0
    // Predicated region
    $region10: #{prompt_forward.1} parent=1 // pred_check
      %p15 = pneg %p14
    $region11: #{prompt_forward.1} parent=1 // pred_check_branch
      %17 = sbr.rel (%p15) target = $region13
    $region12: #{prompt_forward.1} parent=1 // pred_region
      %vm18 = vcmask 254976
      %19 = vst.msk [vmem:[#allocation2] sm:$0x3] %vm18, 0.0
    $region13: #{prompt_forward.1} parent=1 // pred_fallthru
      _
    %v20 = vld [vmem:[#allocation2] sm:$0x3]
    %v21 = vld [vmem:[%s0] sm:$0xff]
    %v22 = vld [vmem:[%s0 + $0x8] sm:$0xff]
    %vm23 = vcmask 261120
    %v24 = vsel %vm23, %v21, 0.0
    %v25 = vrot.slane %v24, 4
    %v26 = vadd.f32 %v24, %v25
    %v27 = vrot.slane %v26, 2
    %v28 = vadd.f32 %v26, %v27
    %v29 = vrot.slane %v28, 1
    %v30 = vadd.f32 %v28, %v29
    %v31 = vsel %vm23, %v22, 0.0
    %v32 = vrot.slane %v31, 4
    %v33 = vadd.f32 %v31, %v32
    %v34 = vrot.slane %v33, 2
    %v35 = vadd.f32 %v33, %v34
    %v36 = vrot.slane %v35, 1
    %v37 = vadd.f32 %v35, %v36
    %vm40 = vcmask 1041409
    %v41 = vsel %vm40, %v37, %v30
    %v43 = vadd.f32 %v20, %v41
    %vm44 = vcmask 254976
    %45 = vst.msk [vmem:[#allocation2] sm:$0x3] %vm44, %v43
    // Predicated region
    $region14: #{prompt_forward.1} parent=1 // pred_check
      %p46 = pneg %p14
    $region15: #{prompt_forward.1} parent=1 // pred_check_branch
      %48 = sbr.rel (%p46) target = $region17
    $region16: #{prompt_forward.1} parent=1 // pred_region
      %v49 = vld [vmem:[#allocation2] sm:$0x3]
      %v50 = vmul.f32 %v49, %v49
      %v51 = vsel %vm44, %v50, 0.0
      %52 = vadd.xlane.f32.xlu0 %v51
      %v53 = vpop.xlane.xlu0 %52
      %v54 = vmax.f32 %v53, 1e-12
      %v55 = vrsqrt.pop %v54
      %v56 = vmul.f32 %v49, %v55
      %57 = vst.msk [vmem:[#allocation3] sm:$0x3] %vm44, %v56
      %v58 = vld [vmem:[%s1] sm:$0xff]
      %v59 = vld [vmem:[%s1 + $0x8] sm:$0x3]
      %v62 = vunpack.c.l.s4 1966171168
      %v63 = vunpack.c.0.s8 %v62
      %v64 = vlaneseq
      %v65 = vshrl.u32 %v64, 7
      %v66 = vsub.s32 %v63, %v65
      %v67 = vrot.slane %v56, %v66
      %v68 = vcombine.high %v67, %v67
      %v70 = vunpack.c.l.s4 1966171168
      %v71 = vunpack.c.0.s8 %v70
      %v72 = vlaneseq
      %v73 = vshrl.u32 %v72, 7
      %v74 = vsub.s32 %v71, %v73
      %v75 = vrot.slane %v67, %v74
      %v77 = vunpack.c.l.s4 1966171168
      %v78 = vunpack.c.0.s8 %v77
      %v79 = vlaneseq
      %v80 = vshrl.u32 %v79, 7
      %v81 = vsub.s32 %v78, %v80
      %v82 = vrot.slane %v68, %v81
      %v83 = vlaneseq
      %v84 = vshrl.u32 %v83, 7
      %v85 = vsub.s32 0, %v84
      %v86 = vrot.slane %v75, %v85
      %v87 = vlaneseq
      %v88 = vshrl.u32 %v87, 7
      %v89 = vsub.s32 0, %v88
      %v90 = vrot.slane %v82, %v89
      %v93 = vmul.f32 %v86, %v58
      %v94 = vmul.f32 %v86, %v59
      %v95 = vmul.f32 %v90, %v58
      %v96 = vmul.f32 %v90, %v59
      %97 = vst.msk [vmem:[%s3] sm:$0xff] %vm23, %v93
      %98 = vst.msk [vmem:[%s3 + $0x8] sm:$0x3] %vm44, %v94
      %99 = vst.msk [vmem:[%s3 + $0x10] sm:$0xff] %vm23, %v95
      %100 = vst.msk [vmem:[%s3 + $0x18] sm:$0x3] %vm44, %v96
    $region17: #{prompt_forward.1} parent=1 // pred_fallthru
      _
    // Predicated region
    $region18: #{prompt_forward.1} parent=1 // pred_check
      _
    $region19: #{prompt_forward.1} parent=1 // pred_check_branch
      %102 = sbr.rel (0) target = $region21
    $region20: #{prompt_forward.1} parent=1 // pred_region
      %s104 = ssub.s32 32, 32
      %105 = vsyncadd [#allocation4], %s104
      %s107 = sshll.u32 [#allocation3], 4
      %s108 = int_to_ptr.vmem [resolvable:$true] %s107
      %110 = dma.vmem_to_hbm [thread:$0]  %s108, 32, %s2, [#allocation4]
    $region21: #{prompt_forward.1} parent=1 // pred_fallthru
      _
    // Predicated region
    $region22: #{prompt_forward.1} parent=1 // pred_check
      _
    $region23: #{prompt_forward.1} parent=1 // pred_check_branch
      %112 = sbr.rel (0) target = $region25
    $region24: #{prompt_forward.1} parent=1 // pred_region
      _
    $region25: #{prompt_forward.1} parent=1 // pred_fallthru
      _
    // Predicated region
    $region26: #{prompt_forward.1} parent=1 // pred_check
      _
    $region27: #{prompt_forward.1} parent=1 // pred_check_branch
      %114 = sbr.rel (0) target = $region29
    $region28: #{prompt_forward.1} parent=1 // pred_region
      %115 = dma.done [#allocation4], 32
    $region29: #{prompt_forward.1} parent=1 // pred_fallthru
      _
    // Predicated region
    $region30: #{prompt_forward.1} parent=1 // pred_check
      _
    $region31: #{prompt_forward.1} parent=1 // pred_check_branch
      %117 = sbr.rel (0) target = $region33
    $region32: #{prompt_forward.1} parent=1 // pred_region
      _
    $region33: #{prompt_forward.1} parent=1 // pred_fallthru
      _
    %118 = vsyncpa [#allocation4], 1

</llo_original>
